<compile_context>
chip_gen: v6e
topology: v6e:2x2x1
jax: 0.10.0
libtpu: 0.0.40
codegen_flags: <defaults>
</compile_context>

<pallas_src>
import math

import jax
import jax.numpy as jnp
from jax.experimental import pallas as pl
from jax.experimental.pallas import tpu as pltpu

DIM = 16         # embedding dim (module default)
M_CONST = 10000  # frequency base (module default)


def _sinusoidal_kernel(freqs_ref, x_ref, o_ref):
    # freqs_ref: (half_dim, 1) f32  -- constant frequency table (resident in VMEM)
    # x_ref:     (1, TB)       f32  -- positions, lane-dense
    # o_ref:     (dim, TB)          -- transposed embedding tile
    emb = freqs_ref[...] * x_ref[...]                      # (half_dim, TB) broadcast on VPU
    # One full-tile store: sin rows [0, half) stacked over cos rows [half, dim)
    # on the sublane axis.  Unmasked, vreg-aligned for f32 and bf16 outputs.
    full = jnp.concatenate([jnp.sin(emb), jnp.cos(emb)], axis=0)
    o_ref[...] = full.astype(o_ref.dtype)


def _reference(x, dim=DIM, M=M_CONST):
    """Pure-JAX reference mirroring the PyTorch forward exactly."""
    half_dim = dim // 2
    scale = math.log(M) / half_dim
    freqs = jnp.exp(jnp.arange(half_dim, dtype=jnp.float32) * -scale)
    emb = jnp.asarray(x, jnp.float32)[..., None] * freqs[None, ...]
    return jnp.concatenate([jnp.sin(emb), jnp.cos(emb)], axis=-1)


def sinusoidal_pos_emb(
    x,
    dim=DIM,
    M=M_CONST,
    block_b=32768,
    out_dtype=jnp.float32,
    min_kernel_batch=1024,
    channels_last=True,
):
    """Sinusoidal position/timestep embedding.

    x: positions/timesteps of any shape.
    Returns x.shape + (dim,) if channels_last else (dim,) + x.shape.

    out_dtype=jnp.bfloat16 halves HBM writeback (helps writeback-bound
    v5e/v6e); default f32 matches the PyTorch module.
    """
    assert dim % 2 == 0, "SinusoidalPosEmb kernel requires an even dim"
    orig_shape = jnp.shape(x)
    half_dim = dim // 2
    B = 1
    for s in orig_shape:
        B *= s

    # Fast path: for a handful of timesteps the pure-JAX formula fused by XLA
    # beats any standalone kernel (launch + pad + transpose overhead).
    if B < min_kernel_batch:
        out = _reference(x, dim=dim, M=M).astype(out_dtype)
        if channels_last:
            return out
        return jnp.moveaxis(out, -1, 0)

    xf = jnp.asarray(x, jnp.float32).reshape(1, -1)        # (1, B): B on the lane axis

    # Tile size along B: multiple of 128 (lane width), capped at block_b, and
    # chosen so there are >= 2 grid steps whenever B spans > 1 lane chunk
    # (lets v7x shard steps across its 2 TensorCores).
    block_cap = max(128, (block_b // 128) * 128)
    lane_chunks = pl.cdiv(B, 128)
    tb = max(128, min(block_cap, 128 * pl.cdiv(lane_chunks, 2)))
    nb = pl.cdiv(B, tb)
    b_pad = nb * tb
    if b_pad != B:
        xf = jnp.pad(xf, ((0, 0), (0, b_pad - B)))          # zero pad; sliced off below

    # Constant frequency table freqs[k] = exp(-k*log(M)/half_dim), computed
    # with jnp (constant-folded under jit; identical exp to the reference).
    scale = math.log(M) / half_dim
    freqs = jnp.exp(
        jnp.arange(half_dim, dtype=jnp.float32) * -scale
    ).reshape(half_dim, 1)

    out_t = pl.pallas_call(
        _sinusoidal_kernel,
        out_shape=jax.ShapeDtypeStruct((dim, b_pad), out_dtype),
        grid=(nb,),
        in_specs=[
            pl.BlockSpec((half_dim, 1), lambda i: (0, 0)),   # constant, resident
            pl.BlockSpec((1, tb), lambda i: (0, i)),          # lane-dense positions
        ],
        out_specs=pl.BlockSpec((dim, tb), lambda i: (0, i)),  # lane-dense output
        compiler_params=pltpu.CompilerParams(
            # Independent batch tiles; default scoped-VMEM limit is ample for
            # the ~4.5 MiB of double-buffered tiles on every chip generation.
            dimension_semantics=("parallel",),
        ),
    )(freqs, xf)

    out_t = out_t[:, :B]
    if channels_last:
        # (B, dim) module layout.  NOTE: for very large B this materialized
        # transpose is an extra HBM pass — prefer channels_last=False and let
        # the consumer take the (dim, B) layout directly.
        return out_t.T.reshape(*orig_shape, dim)
    return out_t.reshape(dim, *orig_shape)


if __name__ == "__main__":
    key = jax.random.PRNGKey(0)
    k1, k2 = jax.random.split(key)

    # Typical module usage: a small (2, 8) batch of diffusion timesteps.
    # (Goes through the fused pure-JAX fast path by design.)
    x_small = jax.random.uniform(k1, (2, 8), dtype=jnp.float32) * 1000.0
    out_small = jax.block_until_ready(sinusoidal_pos_emb(x_small))
    ref_small = _reference(x_small)
    assert out_small.shape == (2, 8, DIM), out_small.shape
    assert jnp.allclose(out_small, ref_small, atol=1e-4, rtol=1e-4), \
        "mismatch vs reference (fast path)"

    # Exercise the Pallas kernel path: multi-step grid + batch padding
    # (B=300, TB=256 -> 2 grid steps), still a small shape.
    x_kern = jax.random.uniform(k2, (300,), dtype=jnp.float32) * 1000.0
    out_kern = jax.block_until_ready(
        sinusoidal_pos_emb(x_kern, block_b=256, min_kernel_batch=0))
    ref_kern = _reference(x_kern)
    assert out_kern.shape == (300, DIM), out_kern.shape
    assert jnp.allclose(out_kern, ref_kern, atol=1e-4, rtol=1e-4), \
        "mismatch vs reference (kernel path)"

    # Channels-first kernel path (no materialized wrapper transpose).
    out_cf = jax.block_until_ready(
        sinusoidal_pos_emb(x_kern, block_b=256, min_kernel_batch=0,
                           channels_last=False))
    assert out_cf.shape == (DIM, 300), out_cf.shape
    assert jnp.allclose(out_cf.T, ref_kern, atol=1e-4, rtol=1e-4), \
        "mismatch vs reference (channels-first kernel path)"

    print("KERNEL_OK")
</pallas_src>

<mosaic_0001>
module attributes {stable_mosaic.version = 11 : i64} {
  func.func @_sinusoidal_kernel(%arg0: i32, %arg1: memref<8x1xf32, #tpu.memory_space<vmem>>, %arg2: memref<1x256xf32, #tpu.memory_space<vmem>>, %arg3: memref<16x256xf32, #tpu.memory_space<vmem>>) attributes {dimension_semantics = [#tpu.dimension_semantics<parallel>], iteration_bounds = array<i64: 2>, scalar_prefetch = 0 : i64, scratch_operands = 0 : i64, tpu.core_type = #tpu.core_type<tc>, window_params = [{pipeline_mode = #tpu.pipeline_mode<synchronous>, transform_indices = @transform_0, window_bounds = array<i64: 8, 1>}, {transform_indices = @transform_1, window_bounds = array<i64: 1, 256>}, {transform_indices = @transform_2, window_bounds = array<i64: 16, 256>}]} {
    %c0 = arith.constant 0 : index
    %c0_0 = arith.constant 0 : index
    %0 = vector.load %arg1[%c0, %c0_0] : memref<8x1xf32, #tpu.memory_space<vmem>>, vector<8x1xf32>
    %c0_1 = arith.constant 0 : index
    %c0_2 = arith.constant 0 : index
    %1 = vector.load %arg2[%c0_1, %c0_2] : memref<1x256xf32, #tpu.memory_space<vmem>>, vector<1x256xf32>
    %2 = vector.broadcast %0 : vector<8x1xf32> to vector<8x256xf32>
    %3 = vector.broadcast %1 : vector<1x256xf32> to vector<8x256xf32>
    %4 = arith.mulf %2, %3 : vector<8x256xf32>
    %5 = math.sin %4 : vector<8x256xf32>
    %6 = math.cos %4 : vector<8x256xf32>
    %7 = tpu.concatenate %5, %6 in 0 : vector<8x256xf32>, vector<8x256xf32> -> vector<16x256xf32>
    %c0_3 = arith.constant 0 : index
    %c0_4 = arith.constant 0 : index
    %8 = vector.load %arg3[%c0_3, %c0_4] : memref<16x256xf32, #tpu.memory_space<vmem>>, vector<16x256xf32>
    tpu.vector_store %arg3[%c0_3, %c0_4], %7 {strides = array<i32>} : memref<16x256xf32, #tpu.memory_space<vmem>>, vector<16x256xf32>,
    return
  }
  func.func @transform_0(%arg0: i32) -> (i32, i32) {
    %c0_i32 = arith.constant 0 : i32
    %c0_i32_0 = arith.constant 0 : i32
    %c0_i32_1 = arith.constant 0 : i32
    return %c0_i32, %c0_i32_0 : i32, i32
  }
  func.func @transform_1(%arg0: i32) -> (i32, i32) {
    %c0_i32 = arith.constant 0 : i32
    %c0_i32_0 = arith.constant 0 : i32
    return %c0_i32, %arg0 : i32, i32
  }
  func.func @transform_2(%arg0: i32) -> (i32, i32) {
    %c0_i32 = arith.constant 0 : i32
    %c0_i32_0 = arith.constant 0 : i32
    return %c0_i32, %arg0 : i32, i32
  }
}

</mosaic_0001>

<llo_original>
// kernel: tpu_custom_call.1
$region0: #{tpu_custom_call.1}
  #allocation0 [shape = 'u32[]', space=smem, size = 0x4, offset = 0x4, fixed_abs, tag = 'smem constant byte address 0x4 - core index']
  #allocation1 [shape = 'u32[144,128]{1,0:T(1,128)}', space=vmem, size = 0x12000, scoped, tag = 'internal scratch']
  %s0 = inlined_call_operand.vmem [shape: f32[8,1], index: 0, kind: input, shape index: {}]
  %s1 = inlined_call_operand.vmem [shape: f32[1,512], index: 1, kind: input, shape index: {}]
  %s2 = inlined_call_operand.hbm [shape: f32[16,512], index: 2, kind: output, shape index: {}]
  %s3 = sld [smem:[#allocation0]]
  $region41: #{tpu_custom_call.1} parent=0
    _
  %s5 = ssub.s32 1, %s3
  %s6 = scalar_select 0, %s5, %s3
  $region1: #{tpu_custom_call.1} parent=0
    #allocation2 [shape = 'u8[32768]{0}', space=vmem, size = 0x8000, scoped, tag = 'output window, operand 0']
    #allocation3 [shape = 's32[2]{0}', space=sflag, size = 0x8, scoped, tag = 'scoped memory for tpu_custom_call.1']
    %7 = vsyncpa [#allocation3], 0
    %s8 = scalar_lea.sflag [#allocation3], 1
    %9 = vsyncpa %s8, 0
    loop: start=0, step=1, limit=4
    $region2: #{tpu_custom_call.1} parent=1 // loop_pre_header
      _
    $region3: #{tpu_custom_call.1} parent=1 // loop_header
      %s11 = sphi 0, %s15
      %p12 = scmp.ge.s32.totalorder %s11, 4
      %s19 = sphi 0, %s19
      %s21 = sphi 0, %s19
      %s22 = sphi 0, %s21
      %s36 = sphi 0, %s22
      %s42 = sphi 0, %s44
      %s45 = sphi 0, %s42
      %s46 = sphi 0, %s45
      %s62 = sphi 0, %s46
      %s68 = sphi 0, %s70
      %s71 = sphi 0, %s68
      %s72 = sphi 0, %s71
      %s88 = sphi 0, %s72
    $region4: #{tpu_custom_call.1} parent=1 // loop_header_branch
      %14 = sbr.rel (%p12) target = $region8
    $region5: #{tpu_custom_call.1} parent=1 // loop_body
      %s16 = ssub.s32 %s11, 1
      %s17 = ssub.s32 %s11, 2
      %s18 = sadd.s32 %s11, 1
      %s20 = sadd.s32 %s19, 1
      %p23 = scmp.eq.s32.totalorder %s11, 1
      %p24 = scmp.ne.s32.totalorder %s19, %s21
      %p25 = scmp.eq.s32.totalorder %s11, 0
      %p26 = por %p24, %p25
      %p27 = scmp.ne.s32.totalorder %s19, %s21
      %p28 = scmp.eq.s32.totalorder %s16, 1
      %p29 = por %p27, %p28
      %p30 = scmp.ne.s32.totalorder %s21, %s22
      %p31 = scmp.eq.s32.totalorder %s16, 0
      %p32 = por %p30, %p31
      %p33 = scmp.ne.s32.totalorder %s21, %s22
      %p34 = scmp.eq.s32.totalorder %s17, 1
      %p35 = por %p33, %p34
      %p37 = scmp.ne.s32.totalorder %s22, %s36
      %p38 = scmp.eq.s32.totalorder %s17, 0
      %p39 = por %p37, %p38
      %s40 = ssub.s32 %s11, %s18
      %p41 = scmp.eq.s32.totalorder %s40, 0
      %s43 = sadd.s32 %s42, 1
      %s44 = scalar_select %p41, %s42, %s43
      %p47 = pneg %p41
      %p48 = scmp.eq.s32.totalorder %s11, 1
      %p49 = por %p47, %p48
      %p50 = scmp.ne.s32.totalorder %s42, %s45
      %p51 = scmp.eq.s32.totalorder %s11, 0
      %p52 = por %p50, %p51
      %p53 = scmp.ne.s32.totalorder %s42, %s45
      %p54 = scmp.eq.s32.totalorder %s16, 1
      %p55 = por %p53, %p54
      %p56 = scmp.ne.s32.totalorder %s45, %s46
      %p57 = scmp.eq.s32.totalorder %s16, 0
      %p58 = por %p56, %p57
      %p59 = scmp.ne.s32.totalorder %s45, %s46
      %p60 = scmp.eq.s32.totalorder %s17, 1
      %p61 = por %p59, %p60
      %p63 = scmp.ne.s32.totalorder %s46, %s62
      %p64 = scmp.eq.s32.totalorder %s17, 0
      %p65 = por %p63, %p64
      %s66 = ssub.s32 %s11, %s18
      %p67 = scmp.eq.s32.totalorder %s66, 0
      %s69 = sadd.s32 %s68, 1
      %s70 = scalar_select %p67, %s68, %s69
      %p73 = pneg %p67
      %p74 = scmp.eq.s32.totalorder %s11, 1
      %p75 = por %p73, %p74
      %p76 = scmp.ne.s32.totalorder %s68, %s71
      %p77 = scmp.eq.s32.totalorder %s11, 0
      %p78 = por %p76, %p77
      %p79 = scmp.ne.s32.totalorder %s68, %s71
      %p80 = scmp.eq.s32.totalorder %s16, 1
      %p81 = por %p79, %p80
      %p82 = scmp.ne.s32.totalorder %s71, %s72
      %p83 = scmp.eq.s32.totalorder %s16, 0
      %p84 = por %p82, %p83
      %p85 = scmp.ne.s32.totalorder %s71, %s72
      %p86 = scmp.eq.s32.totalorder %s17, 1
      %p87 = por %p85, %p86
      %p89 = scmp.ne.s32.totalorder %s72, %s88
      %p90 = scmp.eq.s32.totalorder %s17, 0
      %p91 = por %p89, %p90
      %p92 = scmp.le.s32.totalorder 1, %s11
      %p93 = scmp.lt.s32.totalorder %s11, 3
      %p94 = pnand %p92, %p93
      %p95 = pneg %p94
      // Predicated region
      $region9: #{tpu_custom_call.1} parent=5 // pred_check
        _
      $region10: #{tpu_custom_call.1} parent=5 // pred_check_branch
        %97 = sbr.rel (%p94) target = $region12
      $region11: #{tpu_custom_call.1} parent=5 // pred_region
        %s98 = ssub.s32 %s11, 1
        // Predicated region
        $region13: #{tpu_custom_call.1} parent=11 // pred_check
          %p99 = pneg %p32
        $region14: #{tpu_custom_call.1} parent=11 // pred_check_branch
          %101 = sbr.rel (%p99) target = $region16
        $region15: #{tpu_custom_call.1} parent=11 // pred_region
          _
        $region16: #{tpu_custom_call.1} parent=11 // pred_fallthru
          _
      $region12: #{tpu_custom_call.1} parent=5 // pred_fallthru
        _
      %p102 = scmp.lt.s32.totalorder %s11, 2
      // Predicated region
      $region17: #{tpu_custom_call.1} parent=5 // pred_check
        %p103 = pneg %p102
      $region18: #{tpu_custom_call.1} parent=5 // pred_check_branch
        %105 = sbr.rel (%p103) target = $region20
      $region19: #{tpu_custom_call.1} parent=5 // pred_region
        // Predicated region
        $region21: #{tpu_custom_call.1} parent=19 // pred_check
          %p106 = pneg %p52
        $region22: #{tpu_custom_call.1} parent=19 // pred_check_branch
          %108 = sbr.rel (%p106) target = $region24
        $region23: #{tpu_custom_call.1} parent=19 // pred_region
          %s109 = smul.u32 2, %s11
          %p110 = scmp.lt.s32.totalorder %s109, 3
          %s111 = scalar_select %p110, %s109, 3
          %s112 = scalar_lea.vmem %s1, %s111
          %s113 = smul.u32 2, %s11
        $region24: #{tpu_custom_call.1} parent=19 // pred_fallthru
          _
      $region20: #{tpu_custom_call.1} parent=5 // pred_fallthru
        _
      %p114 = scmp.le.s32.totalorder 1, %s11
      %p115 = scmp.lt.s32.totalorder %s11, 3
      %p116 = pnand %p114, %p115
      %p117 = pneg %p116
      // Predicated region
      $region25: #{tpu_custom_call.1} parent=5 // pred_check
        _
      $region26: #{tpu_custom_call.1} parent=5 // pred_check_branch
        %119 = sbr.rel (%p116) target = $region28
      $region27: #{tpu_custom_call.1} parent=5 // pred_region
        %s120 = ssub.s32 %s11, 1
        %p121 = pneg %p32
        %p122 = pneg %p29
        %s123 = smul.u32 2, %s16
        %p124 = scmp.lt.s32.totalorder %s123, 3
        %s125 = scalar_select %p124, %s123, 3
        %s126 = scalar_lea.vmem %s1, %s125
        %p127 = pneg %p58
        %p128 = pneg %p55
        %p129 = pneg %p84
        %p130 = pneg %p81
        %s131 = sand.u32 %s71, 1
        %s132 = scalar_lea.sflag [#allocation3], %s131
        %s133 = sand.u32 %s71, 1
        %s134 = smul.addr %s133, 32
        %s135 = scalar_lea.vmem [#allocation2], %s134
        %s136 = smul.u32 2, %s16
        %p137 = scmp.lt.s32.totalorder %s136, 3
        %s138 = scalar_select %p137, %s136, 3
        %s139 = scalar_lea.vmem %s1, %s138
        %s140 = smul.u32 2, %s16
        %s141 = smul.u32 2, %s16
        %v142 = vld [vmem:[%s0] sm:$0xff]
        %v143 = vld [vmem:[%s139] sm:$0x3]
        %145 = vset.pattern.permute.xlu0 0
        %146 = vperm.xlu0 %145, %v142
        %v147 = vpop.permute.xlu0 %146
        %v150 = vlaneseq
        %v151 = vshrl.u32 %v150, 7
        %v152 = vsub.s32 0, %v151
        %v153 = vrot.slane %v143, %v152
        %v154 = vlaneseq
        %v155 = vshrl.u32 %v154, 7
        %v156 = vsub.s32 1, %v155
        %v157 = vrot.slane %v143, %v156
        %v160 = vmul.f32 %v147, %v153
        %v161 = vmul.f32 %v147, %v157
        %v162 = vand.u32 2147483647, %v160
        %vm163 = vcmp.le.f32.partialorder %v162, 0.7853982
        %vm164 = vcmp.lt.s32.totalorder %v160, 0
        %v165 = vand.u32 %v160, 2139095040
        %v166 = vshrl.u32 %v165, 23
        %v167 = vsub.s32 %v166, 127
        %v168 = vand.u32 2147483647, %v160
        %v169 = vand.u32 %v168, 8388607
        %v170 = vor.u32 %v169, 8388608
        %v171 = vsub.s32 0, %v170
        %v172 = vadd.s32 %v167, 1
        %vm173 = vcmp.gt.s32.totalorder %v172, 0
        %v174 = vsel %vm173, %v172, 0
        %v175 = vshrl.u32 %v174, 5
        %v176 = vand.u32 %v174, 31
        %v177 = vsub.s32 32, %v176
        %v178 = vshrl.u32 683565275, %v177
        %v179 = vshll.u32 683565275, %v176
        %v180 = vshrl.u32 2475754826, %v177
        %v181 = vor.u32 %v179, %v180
        %v182 = vshll.u32 2475754826, %v176
        %v183 = vshrl.u32 2131351028, %v177
        %v184 = vor.u32 %v182, %v183
        %v185 = vshll.u32 2131351028, %v176
        %v186 = vshrl.u32 2102212464, %v177
        %v187 = vor.u32 %v185, %v186
        %v188 = vshll.u32 2102212464, %v176
        %v189 = vshrl.u32 920167782, %v177
        %v190 = vor.u32 %v188, %v189
        %v191 = vshll.u32 920167782, %v176
        %v192 = vshrl.u32 1326507024, %v177
        %v193 = vor.u32 %v191, %v192
        %vm194 = vcmp.lt.s32.totalorder %v175, 1
        %vm195 = vcmp.lt.s32.totalorder %v175, 2
        %vm196 = vcmp.lt.s32.totalorder %v175, 3
        %vm197 = vcmp.lt.s32.totalorder %v175, 4
        %v198 = vsel %vm194, %v178, %v181
        %v199 = vsel %vm197, %v187, 2102212464
        %v200 = vsel %vm196, %v184, %v199
        %v201 = vsel %vm195, %v198, %v200
        %v202 = vsel %vm194, %v181, %v184
        %v203 = vsel %vm197, %v190, 920167782
        %v204 = vsel %vm196, %v187, %v203
        %v205 = vsel %vm195, %v202, %v204
        %v206 = vsel %vm194, %v184, %v187
        %v207 = vsel %vm197, %v193, 1326507024
        %v208 = vsel %vm196, %v190, %v207
        %v209 = vsel %vm195, %v206, %v208
        %v210 = vshll.u32 %v170, 8
        %v211 = vmul.u32.u64.compose %v210, %v209
        %v212 = vextract.low.u32 %v211
        %v213 = vextract.high.u32 %v211
        %v214 = vmul.u32.u64.compose %v210, %v205
        %v215 = vextract.low.u32 %v214
        %v216 = vextract.high.u32 %v214
        %v217 = vmul.u32 %v210, %v201
        %v218 = vadd.s32 %v213, %v215
        %vm219 = vc.u32 %v213, %v215
        %v220 = vadd.s32 %v216, 1
        %v221 = vsel %vm219, %v220, %v216
        %v222 = vadd.s32 %v217, %v221
        %v223 = vadd.s32 %v222, 536870912
        %v224 = vshrl.u32 %v223, 30
        %v225 = vshll.u32 %v224, 30
        %v226 = vsub.s32 %v222, %v225
        %vm227 = vcmp.lt.s32.totalorder %v226, 0
        %v228 = vsub.s32 0, %v226
        %v229 = vsel %vm227, %v228, %v226
        %v230 = vclz %v229
        %v231 = vsub.s32 %v230, 2
        %vm232 = vcmp.gt.s32.totalorder 0, %v231
        %v233 = vsel %vm232, 0, %v231
        %v234 = vsub.s32 32, %v233
        %v235 = vshll.u32 %v226, %v233
        %v236 = vshrl.u32 %v218, %v234
        %v237 = vor.u32 %v235, %v236
        %v238 = vsub.s32 4294967266, %v233
        %v239 = vadd.s32 %v238, 127
        %v240 = vshll.u32 %v239, 23
        %v241 = vor.u32 4788187, %v240
        %v242 = vand.u32 2147483647, %v241
        %v244 = vcvt.s32.f32 %v237
        %v245 = vmul.f32 %v244, %v242
        %v246 = vxor.u32 %v245, 2147483648
        %v247 = vsel %vm164, %v246, %v245
        %v248 = vsub.s32 4, %v224
        %v249 = vsel %vm164, %v248, %v224
        %v250 = vsel %vm163, %v160, %v247
        %v251 = vsel %vm163, 0, %v249
        %v252 = vcosq.f32.pop %v250
        %v253 = vsinq.f32.pop %v250
        %vm254 = vweird.f32 %v160
        %v255 = vadd.s32 %v251, 3
        %v256 = vand.u32 %v255, 3
        %vm257 = vcmp.lt.s32.totalorder %v256, 2
        %vm258 = vcmp.eq.s32.totalorder %v256, 0
        %v259 = vxor.u32 %v253, 2147483648
        %v260 = vsel %vm258, %v252, %v259
        %vm261 = vcmp.eq.s32.totalorder %v256, 2
        %v262 = vxor.u32 %v252, 2147483648
        %v263 = vsel %vm261, %v262, %v253
        %v264 = vsel %vm257, %v260, %v263
        %v265 = vsel %vm254, nan, %v264
        %v266 = vand.u32 2147483647, %v161
        %vm267 = vcmp.le.f32.partialorder %v266, 0.7853982
        %vm268 = vcmp.lt.s32.totalorder %v161, 0
        %v269 = vand.u32 %v161, 2139095040
        %v270 = vshrl.u32 %v269, 23
        %v271 = vsub.s32 %v270, 127
        %v272 = vand.u32 2147483647, %v161
        %v273 = vand.u32 %v272, 8388607
        %v274 = vor.u32 %v273, 8388608
        %v275 = vsub.s32 0, %v274
        %v276 = vadd.s32 %v271, 1
        %vm277 = vcmp.gt.s32.totalorder %v276, 0
        %v278 = vsel %vm277, %v276, 0
        %v279 = vshrl.u32 %v278, 5
        %v280 = vand.u32 %v278, 31
        %v281 = vsub.s32 32, %v280
        %v282 = vshrl.u32 683565275, %v281
        %v283 = vshll.u32 683565275, %v280
        %v284 = vshrl.u32 2475754826, %v281
        %v285 = vor.u32 %v283, %v284
        %v286 = vshll.u32 2475754826, %v280
        %v287 = vshrl.u32 2131351028, %v281
        %v288 = vor.u32 %v286, %v287
        %v289 = vshll.u32 2131351028, %v280
        %v290 = vshrl.u32 2102212464, %v281
        %v291 = vor.u32 %v289, %v290
        %v292 = vshll.u32 2102212464, %v280
        %v293 = vshrl.u32 920167782, %v281
        %v294 = vor.u32 %v292, %v293
        %v295 = vshll.u32 920167782, %v280
        %v296 = vshrl.u32 1326507024, %v281
        %v297 = vor.u32 %v295, %v296
        %vm298 = vcmp.lt.s32.totalorder %v279, 1
        %vm299 = vcmp.lt.s32.totalorder %v279, 2
        %vm300 = vcmp.lt.s32.totalorder %v279, 3
        %vm301 = vcmp.lt.s32.totalorder %v279, 4
        %v302 = vsel %vm298, %v282, %v285
        %v303 = vsel %vm301, %v291, 2102212464
        %v304 = vsel %vm300, %v288, %v303
        %v305 = vsel %vm299, %v302, %v304
        %v306 = vsel %vm298, %v285, %v288
        %v307 = vsel %vm301, %v294, 920167782
        %v308 = vsel %vm300, %v291, %v307
        %v309 = vsel %vm299, %v306, %v308
        %v310 = vsel %vm298, %v288, %v291
        %v311 = vsel %vm301, %v297, 1326507024
        %v312 = vsel %vm300, %v294, %v311
        %v313 = vsel %vm299, %v310, %v312
        %v314 = vshll.u32 %v274, 8
        %v315 = vmul.u32.u64.compose %v314, %v313
        %v316 = vextract.low.u32 %v315
        %v317 = vextract.high.u32 %v315
        %v318 = vmul.u32.u64.compose %v314, %v309
        %v319 = vextract.low.u32 %v318
        %v320 = vextract.high.u32 %v318
        %v321 = vmul.u32 %v314, %v305
        %v322 = vadd.s32 %v317, %v319
        %vm323 = vc.u32 %v317, %v319
        %v324 = vadd.s32 %v320, 1
        %v325 = vsel %vm323, %v324, %v320
        %v326 = vadd.s32 %v321, %v325
        %v327 = vadd.s32 %v326, 536870912
        %v328 = vshrl.u32 %v327, 30
        %v329 = vshll.u32 %v328, 30
        %v330 = vsub.s32 %v326, %v329
        %vm331 = vcmp.lt.s32.totalorder %v330, 0
        %v332 = vsub.s32 0, %v330
        %v333 = vsel %vm331, %v332, %v330
        %v334 = vclz %v333
        %v335 = vsub.s32 %v334, 2
        %vm336 = vcmp.gt.s32.totalorder 0, %v335
        %v337 = vsel %vm336, 0, %v335
        %v338 = vsub.s32 32, %v337
        %v339 = vshll.u32 %v330, %v337
        %v340 = vshrl.u32 %v322, %v338
        %v341 = vor.u32 %v339, %v340
        %v342 = vsub.s32 4294967266, %v337
        %v343 = vadd.s32 %v342, 127
        %v344 = vshll.u32 %v343, 23
        %v345 = vor.u32 4788187, %v344
        %v346 = vand.u32 2147483647, %v345
        %v348 = vcvt.s32.f32 %v341
        %v349 = vmul.f32 %v348, %v346
        %v350 = vxor.u32 %v349, 2147483648
        %v351 = vsel %vm268, %v350, %v349
        %v352 = vsub.s32 4, %v328
        %v353 = vsel %vm268, %v352, %v328
        %v354 = vsel %vm267, %v161, %v351
        %v355 = vsel %vm267, 0, %v353
        %v356 = vcosq.f32.pop %v354
        %v357 = vsinq.f32.pop %v354
        %vm358 = vweird.f32 %v161
        %v359 = vadd.s32 %v355, 3
        %v360 = vand.u32 %v359, 3
        %vm361 = vcmp.lt.s32.totalorder %v360, 2
        %vm362 = vcmp.eq.s32.totalorder %v360, 0
        %v363 = vxor.u32 %v357, 2147483648
        %v364 = vsel %vm362, %v356, %v363
        %vm365 = vcmp.eq.s32.totalorder %v360, 2
        %v366 = vxor.u32 %v356, 2147483648
        %v367 = vsel %vm365, %v366, %v357
        %v368 = vsel %vm361, %v364, %v367
        %v369 = vsel %vm358, nan, %v368
        %v370 = vand.u32 2147483647, %v160
        %vm371 = vcmp.le.f32.partialorder %v370, 0.7853982
        %vm372 = vcmp.lt.s32.totalorder %v160, 0
        %v373 = vand.u32 %v160, 2139095040
        %v374 = vshrl.u32 %v373, 23
        %v375 = vsub.s32 %v374, 127
        %v376 = vand.u32 2147483647, %v160
        %v377 = vand.u32 %v376, 8388607
        %v378 = vor.u32 %v377, 8388608
        %v379 = vsub.s32 0, %v378
        %v380 = vadd.s32 %v375, 1
        %vm381 = vcmp.gt.s32.totalorder %v380, 0
        %v382 = vsel %vm381, %v380, 0
        %v383 = vshrl.u32 %v382, 5
        %v384 = vand.u32 %v382, 31
        %v385 = vsub.s32 32, %v384
        %v386 = vshrl.u32 683565275, %v385
        %v387 = vshll.u32 683565275, %v384
        %v388 = vshrl.u32 2475754826, %v385
        %v389 = vor.u32 %v387, %v388
        %v390 = vshll.u32 2475754826, %v384
        %v391 = vshrl.u32 2131351028, %v385
        %v392 = vor.u32 %v390, %v391
        %v393 = vshll.u32 2131351028, %v384
        %v394 = vshrl.u32 2102212464, %v385
        %v395 = vor.u32 %v393, %v394
        %v396 = vshll.u32 2102212464, %v384
        %v397 = vshrl.u32 920167782, %v385
        %v398 = vor.u32 %v396, %v397
        %v399 = vshll.u32 920167782, %v384
        %v400 = vshrl.u32 1326507024, %v385
        %v401 = vor.u32 %v399, %v400
        %vm402 = vcmp.lt.s32.totalorder %v383, 1
        %vm403 = vcmp.lt.s32.totalorder %v383, 2
        %vm404 = vcmp.lt.s32.totalorder %v383, 3
        %vm405 = vcmp.lt.s32.totalorder %v383, 4
        %v406 = vsel %vm402, %v386, %v389
        %v407 = vsel %vm405, %v395, 2102212464
        %v408 = vsel %vm404, %v392, %v407
        %v409 = vsel %vm403, %v406, %v408
        %v410 = vsel %vm402, %v389, %v392
        %v411 = vsel %vm405, %v398, 920167782
        %v412 = vsel %vm404, %v395, %v411
        %v413 = vsel %vm403, %v410, %v412
        %v414 = vsel %vm402, %v392, %v395
        %v415 = vsel %vm405, %v401, 1326507024
        %v416 = vsel %vm404, %v398, %v415
        %v417 = vsel %vm403, %v414, %v416
        %v418 = vshll.u32 %v378, 8
        %v419 = vmul.u32.u64.compose %v418, %v417
        %v420 = vextract.low.u32 %v419
        %v421 = vextract.high.u32 %v419
        %v422 = vmul.u32.u64.compose %v418, %v413
        %v423 = vextract.low.u32 %v422
        %v424 = vextract.high.u32 %v422
        %v425 = vmul.u32 %v418, %v409
        %v426 = vadd.s32 %v421, %v423
        %vm427 = vc.u32 %v421, %v423
        %v428 = vadd.s32 %v424, 1
        %v429 = vsel %vm427, %v428, %v424
        %v430 = vadd.s32 %v425, %v429
        %v431 = vadd.s32 %v430, 536870912
        %v432 = vshrl.u32 %v431, 30
        %v433 = vshll.u32 %v432, 30
        %v434 = vsub.s32 %v430, %v433
        %vm435 = vcmp.lt.s32.totalorder %v434, 0
        %v436 = vsub.s32 0, %v434
        %v437 = vsel %vm435, %v436, %v434
        %v438 = vclz %v437
        %v439 = vsub.s32 %v438, 2
        %vm440 = vcmp.gt.s32.totalorder 0, %v439
        %v441 = vsel %vm440, 0, %v439
        %v442 = vsub.s32 32, %v441
        %v443 = vshll.u32 %v434, %v441
        %v444 = vshrl.u32 %v426, %v442
        %v445 = vor.u32 %v443, %v444
        %v446 = vsub.s32 4294967266, %v441
        %v447 = vadd.s32 %v446, 127
        %v448 = vshll.u32 %v447, 23
        %v449 = vor.u32 4788187, %v448
        %v450 = vand.u32 2147483647, %v449
        %v452 = vcvt.s32.f32 %v445
        %v453 = vmul.f32 %v452, %v450
        %v454 = vxor.u32 %v453, 2147483648
        %v455 = vsel %vm372, %v454, %v453
        %v456 = vsub.s32 4, %v432
        %v457 = vsel %vm372, %v456, %v432
        %v458 = vsel %vm371, %v160, %v455
        %v459 = vsel %vm371, 0, %v457
        %v460 = vcosq.f32.pop %v458
        %v461 = vsinq.f32.pop %v458
        %vm462 = vweird.f32 %v160
        %v463 = vand.u32 %v459, 3
        %vm464 = vcmp.lt.s32.totalorder %v463, 2
        %vm465 = vcmp.eq.s32.totalorder %v463, 0
        %v466 = vxor.u32 %v461, 2147483648
        %v467 = vsel %vm465, %v460, %v466
        %vm468 = vcmp.eq.s32.totalorder %v463, 2
        %v469 = vxor.u32 %v460, 2147483648
        %v470 = vsel %vm468, %v469, %v461
        %v471 = vsel %vm464, %v467, %v470
        %v472 = vsel %vm462, nan, %v471
        %v473 = vand.u32 2147483647, %v161
        %vm474 = vcmp.le.f32.partialorder %v473, 0.7853982
        %vm475 = vcmp.lt.s32.totalorder %v161, 0
        %v476 = vand.u32 %v161, 2139095040
        %v477 = vshrl.u32 %v476, 23
        %v478 = vsub.s32 %v477, 127
        %v479 = vand.u32 2147483647, %v161
        %v480 = vand.u32 %v479, 8388607
        %v481 = vor.u32 %v480, 8388608
        %v482 = vsub.s32 0, %v481
        %v483 = vadd.s32 %v478, 1
        %vm484 = vcmp.gt.s32.totalorder %v483, 0
        %v485 = vsel %vm484, %v483, 0
        %v486 = vshrl.u32 %v485, 5
        %v487 = vand.u32 %v485, 31
        %v488 = vsub.s32 32, %v487
        %v489 = vshrl.u32 683565275, %v488
        %v490 = vshll.u32 683565275, %v487
        %v491 = vshrl.u32 2475754826, %v488
        %v492 = vor.u32 %v490, %v491
        %v493 = vshll.u32 2475754826, %v487
        %v494 = vshrl.u32 2131351028, %v488
        %v495 = vor.u32 %v493, %v494
        %v496 = vshll.u32 2131351028, %v487
        %v497 = vshrl.u32 2102212464, %v488
        %v498 = vor.u32 %v496, %v497
        %v499 = vshll.u32 2102212464, %v487
        %v500 = vshrl.u32 920167782, %v488
        %v501 = vor.u32 %v499, %v500
        %v502 = vshll.u32 920167782, %v487
        %v503 = vshrl.u32 1326507024, %v488
        %v504 = vor.u32 %v502, %v503
        %vm505 = vcmp.lt.s32.totalorder %v486, 1
        %vm506 = vcmp.lt.s32.totalorder %v486, 2
        %vm507 = vcmp.lt.s32.totalorder %v486, 3
        %vm508 = vcmp.lt.s32.totalorder %v486, 4
        %v509 = vsel %vm505, %v489, %v492
        %v510 = vsel %vm508, %v498, 2102212464
        %v511 = vsel %vm507, %v495, %v510
        %v512 = vsel %vm506, %v509, %v511
        %v513 = vsel %vm505, %v492, %v495
        %v514 = vsel %vm508, %v501, 920167782
        %v515 = vsel %vm507, %v498, %v514
        %v516 = vsel %vm506, %v513, %v515
        %v517 = vsel %vm505, %v495, %v498
        %v518 = vsel %vm508, %v504, 1326507024
        %v519 = vsel %vm507, %v501, %v518
        %v520 = vsel %vm506, %v517, %v519
        %v521 = vshll.u32 %v481, 8
        %v522 = vmul.u32.u64.compose %v521, %v520
        %v523 = vextract.low.u32 %v522
        %v524 = vextract.high.u32 %v522
        %v525 = vmul.u32.u64.compose %v521, %v516
        %v526 = vextract.low.u32 %v525
        %v527 = vextract.high.u32 %v525
        %v528 = vmul.u32 %v521, %v512
        %v529 = vadd.s32 %v524, %v526
        %vm530 = vc.u32 %v524, %v526
        %v531 = vadd.s32 %v527, 1
        %v532 = vsel %vm530, %v531, %v527
        %v533 = vadd.s32 %v528, %v532
        %v534 = vadd.s32 %v533, 536870912
        %v535 = vshrl.u32 %v534, 30
        %v536 = vshll.u32 %v535, 30
        %v537 = vsub.s32 %v533, %v536
        %vm538 = vcmp.lt.s32.totalorder %v537, 0
        %v539 = vsub.s32 0, %v537
        %v540 = vsel %vm538, %v539, %v537
        %v541 = vclz %v540
        %v542 = vsub.s32 %v541, 2
        %vm543 = vcmp.gt.s32.totalorder 0, %v542
        %v544 = vsel %vm543, 0, %v542
        %v545 = vsub.s32 32, %v544
        %v546 = vshll.u32 %v537, %v544
        %v547 = vshrl.u32 %v529, %v545
        %v548 = vor.u32 %v546, %v547
        %v549 = vsub.s32 4294967266, %v544
        %v550 = vadd.s32 %v549, 127
        %v551 = vshll.u32 %v550, 23
        %v552 = vor.u32 4788187, %v551
        %v553 = vand.u32 2147483647, %v552
        %v555 = vcvt.s32.f32 %v548
        %v556 = vmul.f32 %v555, %v553
        %v557 = vxor.u32 %v556, 2147483648
        %v558 = vsel %vm475, %v557, %v556
        %v559 = vsub.s32 4, %v535
        %v560 = vsel %vm475, %v559, %v535
        %v561 = vsel %vm474, %v161, %v558
        %v562 = vsel %vm474, 0, %v560
        %v563 = vcosq.f32.pop %v561
        %v564 = vsinq.f32.pop %v561
        %vm565 = vweird.f32 %v161
        %v566 = vand.u32 %v562, 3
        %vm567 = vcmp.lt.s32.totalorder %v566, 2
        %vm568 = vcmp.eq.s32.totalorder %v566, 0
        %v569 = vxor.u32 %v564, 2147483648
        %v570 = vsel %vm568, %v563, %v569
        %vm571 = vcmp.eq.s32.totalorder %v566, 2
        %v572 = vxor.u32 %v563, 2147483648
        %v573 = vsel %vm571, %v572, %v564
        %v574 = vsel %vm567, %v570, %v573
        %v575 = vsel %vm565, nan, %v574
        %576 = vst [vmem:[%s135] sm:$0xff] %v265
        %577 = vst [vmem:[%s135 + $0x8] sm:$0xff] %v369
        %578 = vst [vmem:[%s135 + $0x10] sm:$0xff] %v472
        %579 = vst [vmem:[%s135 + $0x18] sm:$0xff] %v575
        %s580 = sand.u32 %s71, 1
        %s581 = scalar_lea.sflag [#allocation3], %s580
        %s582 = sand.u32 %s71, 1
        %s583 = smul.addr %s582, 32
        %s584 = scalar_lea.vmem [#allocation2], %s583
        // Predicated region
        $region29: #{tpu_custom_call.1} parent=27 // pred_check
          %p585 = pneg %p81
        $region30: #{tpu_custom_call.1} parent=27 // pred_check_branch
          %587 = sbr.rel (%p585) target = $region32
        $region31: #{tpu_custom_call.1} parent=27 // pred_region
          %s588 = smul.u32 2, %s16
          %s590 = ssub.s32 512, 512
          %591 = vsyncadd %s581, %s590
          %s592 = smul.addr %s588, 128
          %s593 = scalar_lea.hbm %s2, %s592
          %s594 = sshll.u32 %s584, 4
          %s595 = int_to_ptr.vmem [resolvable:$true] %s594
          %600 = dma.vmem_to_hbm [thread:$0]  %s595, 512, %s593, %s581, 256, 512, 16
        $region32: #{tpu_custom_call.1} parent=27 // pred_fallthru
          _
      $region28: #{tpu_custom_call.1} parent=5 // pred_fallthru
        _
      %p601 = scmp.le.s32.totalorder 2, %s11
      // Predicated region
      $region33: #{tpu_custom_call.1} parent=5 // pred_check
        %p602 = pneg %p601
      $region34: #{tpu_custom_call.1} parent=5 // pred_check_branch
        %604 = sbr.rel (%p602) target = $region36
      $region35: #{tpu_custom_call.1} parent=5 // pred_region
        %s605 = ssub.s32 %s11, 2
        // Predicated region
        $region37: #{tpu_custom_call.1} parent=35 // pred_check
          %p606 = pneg %p87
        $region38: #{tpu_custom_call.1} parent=35 // pred_check_branch
          %608 = sbr.rel (%p606) target = $region40
        $region39: #{tpu_custom_call.1} parent=35 // pred_region
          %s609 = sand.u32 %s72, 1
          %s610 = scalar_lea.sflag [#allocation3], %s609
          %s611 = sand.u32 %s72, 1
          %s612 = smul.addr %s611, 32
          %s613 = scalar_lea.vmem [#allocation2], %s612
          %614 = dma.done %s610, 512
        $region40: #{tpu_custom_call.1} parent=35 // pred_fallthru
          _
      $region36: #{tpu_custom_call.1} parent=5 // pred_fallthru
        _
    $region6: #{tpu_custom_call.1} parent=1 // loop_footer
      %s15 = sadd.s32 1, %s11
    $region7: #{tpu_custom_call.1} parent=1 // loop_footer_branch
      %10 = sbr.rel target = $region3
    $region8: #{tpu_custom_call.1} parent=1 // loop_exit
      _
    %615 = vsyncpa [#allocation3], 1
    %s616 = scalar_lea.sflag [#allocation3], 1
    %617 = vsyncpa %s616, 1

</llo_original>
